<compile_context>
chip_gen: v7x
topology: tpu7x:2x2x1
jax: 0.10.0
libtpu: 0.0.40
codegen_flags: <defaults>
</compile_context>

<pallas_src>
import jax
import jax.numpy as jnp
from jax.experimental import pallas as pl
from jax.experimental.pallas import tpu as pltpu


def context_block_kernel(x_ref, wm_ref, bm_ref, w1t_ref, b1_ref,
                         gamma_ref, beta_ref, w2t_ref, b2_ref, o_ref):
    # x_ref  : (bt, C, HW)  batch-tile of the input, native dtype
    # wm_ref : (1, C)       conv_mask weight (1x1 conv C -> 1)
    # bm_ref : (1, 1)       conv_mask bias (SMEM scalar)
    # w1t_ref: (C, P), b1_ref/gamma_ref/beta_ref: (1, P)
    # w2t_ref: (P, C), b2_ref: (1, C)
    bt, C, HW = x_ref.shape
    x = x_ref[...]                                             # (bt, C, HW) native dtype

    # --- conv_mask (1x1, C->1) as a batched MXU contraction over C ---
    wm = jnp.broadcast_to(wm_ref[...].astype(x.dtype).reshape(1, 1, C), (bt, 1, C))
    logits = jnp.einsum("boc,bcs->bos", wm, x,
                        preferred_element_type=jnp.float32) + bm_ref[0, 0]   # (bt,1,HW)

    # --- softmax over HW (exp only; the divide is folded into the pooled context) ---
    m = jnp.max(logits, axis=-1, keepdims=True)                # (bt, 1, 1)
    e = jnp.exp(logits - m)                                    # (bt, 1, HW) f32
    denom = jnp.sum(e, axis=-1, keepdims=True)                 # (bt, 1, 1)

    # --- context[b,c] = sum_s x[b,c,s] * e[b,s] / denom : HW reduction on the MXU ---
    ctx = jnp.einsum("bos,bcs->boc", e.astype(x.dtype), x,
                     preferred_element_type=jnp.float32)        # (bt, 1, C)
    ctx = (ctx * pl.reciprocal(denom, approx=False))[:, 0, :]   # (bt, C) f32

    # --- channel_add_conv: 1x1 conv -> LayerNorm([P,1,1]) -> ReLU -> 1x1 conv ---
    t = jnp.dot(ctx, w1t_ref[...], preferred_element_type=jnp.float32) + b1_ref[...]   # (bt, P)
    mu = jnp.mean(t, axis=-1, keepdims=True)
    var = jnp.mean(jnp.square(t - mu), axis=-1, keepdims=True)
    t = (t - mu) * jax.lax.rsqrt(var + 1e-5)
    t = jnp.maximum(t * gamma_ref[...] + beta_ref[...], 0.0)
    add = jnp.dot(t, w2t_ref[...], preferred_element_type=jnp.float32) + b2_ref[...]   # (bt, C)

    # --- fusion: out = x + channel_add_term (broadcast over HW), native-dtype store ---
    o_ref[...] = x + add.astype(o_ref.dtype)[:, :, None]


def _vmem_budget_bytes():
    """Per-generation VMEM budget with headroom for Mosaic internal scratch."""
    cap = 128 << 20
    try:
        info = pltpu.get_tpu_info()
        cap = int(getattr(info, "vmem_capacity_bytes", cap))
    except Exception:
        pass
    return max(32 << 20, cap - (16 << 20))


def _pick_batch_tile(B, per_image_bytes, cap):
    """Largest divisor of B whose x-block fits the cap, keeping >= 2 grid steps
    when possible (cross-step DMA overlap / megacore sharding)."""
    divisors = [d for d in range(1, B + 1) if B % d == 0]
    fitting = [d for d in divisors if d * per_image_bytes <= cap] or [1]
    bt = max(fitting)
    if B // bt < 2:
        smaller = [d for d in fitting if B // d >= 2]
        if smaller:
            bt = max(smaller)
    return bt


def context_block_forward(x, params):
    B, C, H, W = x.shape
    HW = H * W
    P = params["w1"].shape[0]
    itemsize = jnp.dtype(x.dtype).itemsize

    budget = _vmem_budget_bytes()
    block_cap = min(16 << 20, budget // 6)        # ~8 MiB on v7x, 16 MiB on v5e/v6e
    per_image = C * HW * itemsize

    if per_image > block_cap:
        # TODO(synk): HW-tiled online-softmax kernel for oversized images; XLA fallback.
        return _xla_forward(x, params).astype(x.dtype)

    bt = _pick_batch_tile(B, per_image, block_cap)
    nb = B // bt
    block_bytes = bt * per_image

    param_bytes = 4 * (2 * P * C + 2 * C + 3 * P + 4)
    temp_bytes = bt * HW * (8 + itemsize) + 16 * bt * (C + P)
    needed = 4 * block_bytes + 2 * param_bytes + temp_bytes    # in+out, double-buffered
    vmem_limit = int(min(budget, max(16 << 20, needed + (8 << 20))))

    x2 = x.reshape(B, C, HW)                       # free reshape — no pad, no copy
    wm = params["wm"]                              # (1, C)
    bm = params["bm"].reshape(1, 1)
    w1t = params["w1"].T                           # (C, P)
    b1r = params["b1"].reshape(1, P)
    gr = params["gamma"].reshape(1, P)
    br = params["beta"].reshape(1, P)
    w2t = params["w2"].T                           # (P, C)
    b2r = params["b2"].reshape(1, C)

    cost = pl.CostEstimate(
        flops=int(4 * B * C * HW + 4 * B * C * P),
        transcendentals=int(B * HW),
        bytes_accessed=int(2 * B * C * HW * itemsize + param_bytes),
    )

    out = pl.pallas_call(
        context_block_kernel,
        out_shape=jax.ShapeDtypeStruct((B, C, HW), x.dtype),
        grid_spec=pltpu.PrefetchScalarGridSpec(
            num_scalar_prefetch=0,
            grid=(nb,),
            in_specs=[
                pl.BlockSpec((bt, C, HW), lambda i: (i, 0, 0)),        # x (full C, HW extents)
                pl.BlockSpec((1, C), lambda i: (0, 0)),                 # conv_mask weight
                pl.BlockSpec(memory_space=pltpu.MemorySpace.SMEM),      # conv_mask bias
                pl.BlockSpec((C, P), lambda i: (0, 0)),                 # add-conv1 weight^T
                pl.BlockSpec((1, P), lambda i: (0, 0)),                 # add-conv1 bias
                pl.BlockSpec((1, P), lambda i: (0, 0)),                 # LN gamma
                pl.BlockSpec((1, P), lambda i: (0, 0)),                 # LN beta
                pl.BlockSpec((P, C), lambda i: (0, 0)),                 # add-conv2 weight^T
                pl.BlockSpec((1, C), lambda i: (0, 0)),                 # add-conv2 bias
            ],
            out_specs=pl.BlockSpec((bt, C, HW), lambda i: (i, 0, 0)),
        ),
        compiler_params=pltpu.CompilerParams(
            dimension_semantics=("parallel",),
            vmem_limit_bytes=vmem_limit,
        ),
        cost_estimate=cost,
    )(x2, wm, bm, w1t, b1r, gr, br, w2t, b2r)

    return out.reshape(B, C, H, W)


def _xla_forward(x, p):
    """Pure-JAX forward mirroring the PyTorch ContextBlock (also the reference)."""
    B, C, H, W = x.shape
    HW = H * W
    xf = x.reshape(B, C, HW).astype(jnp.float32)
    logits = jnp.einsum("c,bcs->bs", p["wm"][0], xf) + p["bm"][0, 0]
    attn = jax.nn.softmax(logits, axis=-1)
    context = jnp.einsum("bcs,bs->bc", xf, attn)                 # (B, C)
    t = context @ p["w1"].T + p["b1"][None]                       # (B, P)
    mu = jnp.mean(t, axis=-1, keepdims=True)
    var = jnp.mean((t - mu) ** 2, axis=-1, keepdims=True)
    t = (t - mu) * jax.lax.rsqrt(var + 1e-5)
    t = jnp.maximum(t * p["gamma"][None] + p["beta"][None], 0.0)
    add = t @ p["w2"].T + p["b2"][None]                            # (B, C)
    return (xf + add[:, :, None]).reshape(B, C, H, W)


def make_params(key, in_channels, ratio):
    planes = max(1, int(in_channels * ratio))
    k = jax.random.split(key, 4)
    # Shapes follow the PyTorch module.  NOTE: PyTorch zero-inits the last conv of
    # channel_add_conv; we use small random weights so the fused path is exercised.
    wm = jax.random.normal(k[0], (1, in_channels), jnp.float32) * jnp.sqrt(2.0 / in_channels)
    bm = jnp.zeros((1, 1), jnp.float32)
    w1 = jax.random.normal(k[1], (planes, in_channels), jnp.float32) * jnp.sqrt(1.0 / in_channels)
    b1 = jax.random.normal(k[2], (planes,), jnp.float32) * 0.01
    gamma = jnp.ones((planes,), jnp.float32)
    beta = jnp.zeros((planes,), jnp.float32)
    w2 = jax.random.normal(k[3], (in_channels, planes), jnp.float32) * jnp.sqrt(1.0 / planes)
    b2 = jnp.zeros((in_channels,), jnp.float32)
    return dict(wm=wm, bm=bm, w1=w1, b1=b1, gamma=gamma, beta=beta, w2=w2, b2=b2)


if __name__ == "__main__":
    key = jax.random.PRNGKey(0)
    kx, kp = jax.random.split(key)

    B, C, H, W = 2, 16, 16, 16
    ratio = 0.25                      # planes = 4
    x = jax.random.normal(kx, (B, C, H, W), jnp.float32)
    params = make_params(kp, C, ratio)

    out = context_block_forward(x, params)
    out = jax.block_until_ready(out)

    ref = _xla_forward(x, params)
    assert out.shape == (B, C, H, W)
    assert jnp.allclose(out, ref, atol=5e-4, rtol=5e-4), (
        f"max abs diff {float(jnp.max(jnp.abs(out - ref)))}")

    print("KERNEL_OK")
</pallas_src>

<mosaic_0001>
module attributes {stable_mosaic.version = 11 : i64} {
  func.func @context_block_kernel(%arg0: i32, %arg1: memref<1x16x256xf32, #tpu.memory_space<vmem>>, %arg2: memref<1x16xf32, #tpu.memory_space<vmem>>, %arg3: memref<1x1xf32, #tpu.memory_space<smem>>, %arg4: memref<16x4xf32, #tpu.memory_space<vmem>>, %arg5: memref<1x4xf32, #tpu.memory_space<vmem>>, %arg6: memref<1x4xf32, #tpu.memory_space<vmem>>, %arg7: memref<1x4xf32, #tpu.memory_space<vmem>>, %arg8: memref<4x16xf32, #tpu.memory_space<vmem>>, %arg9: memref<1x16xf32, #tpu.memory_space<vmem>>, %arg10: memref<1x16x256xf32, #tpu.memory_space<vmem>>) attributes {dimension_semantics = [#tpu.dimension_semantics<parallel>], iteration_bounds = array<i64: 2>, scalar_prefetch = 0 : i64, scratch_operands = 0 : i64, tpu.core_type = #tpu.core_type<tc>, window_params = [{transform_indices = @transform_0, window_bounds = array<i64: 1, 16, 256>}, {pipeline_mode = #tpu.pipeline_mode<synchronous>, transform_indices = @transform_1, window_bounds = array<i64: 1, 16>}, {transform_indices = @transform_2, window_bounds = array<i64: 1, 1>}, {pipeline_mode = #tpu.pipeline_mode<synchronous>, transform_indices = @transform_3, window_bounds = array<i64: 16, 4>}, {pipeline_mode = #tpu.pipeline_mode<synchronous>, transform_indices = @transform_4, window_bounds = array<i64: 1, 4>}, {pipeline_mode = #tpu.pipeline_mode<synchronous>, transform_indices = @transform_5, window_bounds = array<i64: 1, 4>}, {pipeline_mode = #tpu.pipeline_mode<synchronous>, transform_indices = @transform_6, window_bounds = array<i64: 1, 4>}, {pipeline_mode = #tpu.pipeline_mode<synchronous>, transform_indices = @transform_7, window_bounds = array<i64: 4, 16>}, {pipeline_mode = #tpu.pipeline_mode<synchronous>, transform_indices = @transform_8, window_bounds = array<i64: 1, 16>}, {transform_indices = @transform_9, window_bounds = array<i64: 1, 16, 256>}]} {
    %c0 = arith.constant 0 : index
    %c0_0 = arith.constant 0 : index
    %c0_1 = arith.constant 0 : index
    %0 = vector.load %arg1[%c0, %c0_0, %c0_1] : memref<1x16x256xf32, #tpu.memory_space<vmem>>, vector<1x16x256xf32>
    %c0_2 = arith.constant 0 : index
    %c0_3 = arith.constant 0 : index
    %1 = vector.load %arg2[%c0_2, %c0_3] : memref<1x16xf32, #tpu.memory_space<vmem>>, vector<1x16xf32>
    %2 = vector.shape_cast %1 : vector<1x16xf32> to vector<1x1x16xf32>
    "tpu.trace_start"() <{level = 10 : i32, message = "boc,bcs->bos"}> : () -> ()
    %cst = arith.constant dense<0.000000e+00> : vector<1x1x256xf32>
    %3 = tpu.matmul %2, %0, %cst {dimension_numbers = #tpu.dot_dimension_numbers<[2], [1], [1], [2], [0, 0, 0, 1, 1, 2], [0], [0]>} : vector<1x1x16xf32>, vector<1x16x256xf32>, vector<1x1x256xf32> -> vector<1x1x256xf32>
    "tpu.trace_stop"() : () -> ()
    %c0_4 = arith.constant 0 : index
    %c0_5 = arith.constant 0 : index
    %4 = memref.load %arg3[%c0_4, %c0_5] : memref<1x1xf32, #tpu.memory_space<smem>>
    %5 = vector.broadcast %4 : f32 to vector<1x1x256xf32>
    %6 = arith.addf %3, %5 : vector<1x1x256xf32>
    %cst_6 = arith.constant dense<0xFF800000> : vector<1x1xf32>
    %7 = vector.multi_reduction <maximumf>, %6, %cst_6 [2] : vector<1x1x256xf32> to vector<1x1xf32>
    %8 = vector.shape_cast %7 : vector<1x1xf32> to vector<1x1x1xf32>
    %9 = vector.broadcast %8 : vector<1x1x1xf32> to vector<1x1x256xf32>
    %10 = arith.subf %6, %9 : vector<1x1x256xf32>
    %11 = math.exp %10 : vector<1x1x256xf32>
    %cst_7 = arith.constant dense<0.000000e+00> : vector<1x1xf32>
    %12 = vector.multi_reduction <add>, %11, %cst_7 [2] : vector<1x1x256xf32> to vector<1x1xf32>
    %13 = vector.shape_cast %12 : vector<1x1xf32> to vector<1x1x1xf32>
    "tpu.trace_start"() <{level = 10 : i32, message = "bos,bcs->boc"}> : () -> ()
    %cst_8 = arith.constant dense<0.000000e+00> : vector<1x1x16xf32>
    %14 = tpu.matmul %11, %0, %cst_8 {dimension_numbers = #tpu.dot_dimension_numbers<[2], [2], [1], [1], [0, 0, 0, 1, 1, 1], [0], [0]>} : vector<1x1x256xf32>, vector<1x16x256xf32>, vector<1x1x16xf32> -> vector<1x1x16xf32>
    "tpu.trace_stop"() : () -> ()
    %15 = tpu.reciprocal %13 : vector<1x1x1xf32> -> vector<1x1x1xf32>
    %16 = vector.broadcast %15 : vector<1x1x1xf32> to vector<1x1x16xf32>
    %17 = arith.mulf %14, %16 : vector<1x1x16xf32>
    %18 = vector.shape_cast %17 : vector<1x1x16xf32> to vector<1x16xf32>
    %c0_9 = arith.constant 0 : index
    %c0_10 = arith.constant 0 : index
    %19 = vector.load %arg4[%c0_9, %c0_10] : memref<16x4xf32, #tpu.memory_space<vmem>>, vector<16x4xf32>
    %cst_11 = arith.constant dense<0.000000e+00> : vector<1x4xf32>
    %20 = tpu.matmul %18, %19, %cst_11 {dimension_numbers = #tpu.dot_dimension_numbers<[1], [0], [0], [1], [0, 0, 1, 1], [], []>} : vector<1x16xf32>, vector<16x4xf32>, vector<1x4xf32> -> vector<1x4xf32>
    %c0_12 = arith.constant 0 : index
    %c0_13 = arith.constant 0 : index
    %21 = vector.load %arg5[%c0_12, %c0_13] : memref<1x4xf32, #tpu.memory_space<vmem>>, vector<1x4xf32>
    %22 = arith.addf %20, %21 : vector<1x4xf32>
    %cst_14 = arith.constant dense<0.000000e+00> : vector<1xf32>
    %23 = vector.multi_reduction <add>, %22, %cst_14 [1] : vector<1x4xf32> to vector<1xf32>
    %24 = vector.shape_cast %23 : vector<1xf32> to vector<1x1xf32>
    %cst_15 = arith.constant 4.000000e+00 : f32
    %25 = vector.broadcast %cst_15 : f32 to vector<1x1xf32>
    %26 = arith.divf %24, %25 : vector<1x1xf32>
    %27 = vector.broadcast %26 : vector<1x1xf32> to vector<1x4xf32>
    %28 = arith.subf %22, %27 : vector<1x4xf32>
    %29 = arith.mulf %28, %28 : vector<1x4xf32>
    %cst_16 = arith.constant dense<0.000000e+00> : vector<1xf32>
    %30 = vector.multi_reduction <add>, %29, %cst_16 [1] : vector<1x4xf32> to vector<1xf32>
    %31 = vector.shape_cast %30 : vector<1xf32> to vector<1x1xf32>
    %cst_17 = arith.constant 4.000000e+00 : f32
    %32 = vector.broadcast %cst_17 : f32 to vector<1x1xf32>
    %33 = arith.divf %31, %32 : vector<1x1xf32>
    %34 = vector.broadcast %26 : vector<1x1xf32> to vector<1x4xf32>
    %35 = arith.subf %22, %34 : vector<1x4xf32>
    %cst_18 = arith.constant 9.99999974E-6 : f32
    %36 = vector.broadcast %cst_18 : f32 to vector<1x1xf32>
    %37 = arith.addf %33, %36 : vector<1x1xf32>
    %38 = math.rsqrt %37 : vector<1x1xf32>
    %39 = vector.broadcast %38 : vector<1x1xf32> to vector<1x4xf32>
    %40 = arith.mulf %35, %39 : vector<1x4xf32>
    %c0_19 = arith.constant 0 : index
    %c0_20 = arith.constant 0 : index
    %41 = vector.load %arg6[%c0_19, %c0_20] : memref<1x4xf32, #tpu.memory_space<vmem>>, vector<1x4xf32>
    %42 = arith.mulf %40, %41 : vector<1x4xf32>
    %c0_21 = arith.constant 0 : index
    %c0_22 = arith.constant 0 : index
    %43 = vector.load %arg7[%c0_21, %c0_22] : memref<1x4xf32, #tpu.memory_space<vmem>>, vector<1x4xf32>
    %44 = arith.addf %42, %43 : vector<1x4xf32>
    %cst_23 = arith.constant 0.000000e+00 : f32
    %45 = vector.broadcast %cst_23 : f32 to vector<1x4xf32>
    %46 = arith.maximumf %44, %45 : vector<1x4xf32>
    %c0_24 = arith.constant 0 : index
    %c0_25 = arith.constant 0 : index
    %47 = vector.load %arg8[%c0_24, %c0_25] : memref<4x16xf32, #tpu.memory_space<vmem>>, vector<4x16xf32>
    %cst_26 = arith.constant dense<0.000000e+00> : vector<1x16xf32>
    %48 = tpu.matmul %46, %47, %cst_26 {dimension_numbers = #tpu.dot_dimension_numbers<[1], [0], [0], [1], [0, 0, 1, 1], [], []>} : vector<1x4xf32>, vector<4x16xf32>, vector<1x16xf32> -> vector<1x16xf32>
    %c0_27 = arith.constant 0 : index
    %c0_28 = arith.constant 0 : index
    %49 = vector.load %arg9[%c0_27, %c0_28] : memref<1x16xf32, #tpu.memory_space<vmem>>, vector<1x16xf32>
    %50 = arith.addf %48, %49 : vector<1x16xf32>
    %51 = vector.shape_cast %50 : vector<1x16xf32> to vector<1x16x1xf32>
    %52 = vector.broadcast %51 : vector<1x16x1xf32> to vector<1x16x256xf32>
    %53 = arith.addf %0, %52 : vector<1x16x256xf32>
    %c0_29 = arith.constant 0 : index
    %c0_30 = arith.constant 0 : index
    %c0_31 = arith.constant 0 : index
    %54 = vector.load %arg10[%c0_29, %c0_30, %c0_31] : memref<1x16x256xf32, #tpu.memory_space<vmem>>, vector<1x16x256xf32>
    tpu.vector_store %arg10[%c0_29, %c0_30, %c0_31], %53 {strides = array<i32>} : memref<1x16x256xf32, #tpu.memory_space<vmem>>, vector<1x16x256xf32>,
    return
  }
  func.func @transform_0(%arg0: i32) -> (i32, i32, i32) {
    %c0_i32 = arith.constant 0 : i32
    %c0_i32_0 = arith.constant 0 : i32
    %c0_i32_1 = arith.constant 0 : i32
    return %arg0, %c0_i32, %c0_i32_0 : i32, i32, i32
  }
  func.func @transform_1(%arg0: i32) -> (i32, i32) {
    %c0_i32 = arith.constant 0 : i32
    %c0_i32_0 = arith.constant 0 : i32
    %c0_i32_1 = arith.constant 0 : i32
    return %c0_i32, %c0_i32_0 : i32, i32
  }
  func.func @transform_2(%arg0: i32) -> (i32, i32) {
    %c0_i32 = arith.constant 0 : i32
    %c0_i32_0 = arith.constant 0 : i32
    %c0_i32_1 = arith.constant 0 : i32
    return %c0_i32, %c0_i32_0 : i32, i32
  }
  func.func @transform_3(%arg0: i32) -> (i32, i32) {
    %c0_i32 = arith.constant 0 : i32
    %c0_i32_0 = arith.constant 0 : i32
    %c0_i32_1 = arith.constant 0 : i32
    return %c0_i32, %c0_i32_0 : i32, i32
  }
  func.func @transform_4(%arg0: i32) -> (i32, i32) {
    %c0_i32 = arith.constant 0 : i32
    %c0_i32_0 = arith.constant 0 : i32
    %c0_i32_1 = arith.constant 0 : i32
    return %c0_i32, %c0_i32_0 : i32, i32
  }
  func.func @transform_5(%arg0: i32) -> (i32, i32) {
    %c0_i32 = arith.constant 0 : i32
    %c0_i32_0 = arith.constant 0 : i32
    %c0_i32_1 = arith.constant 0 : i32
    return %c0_i32, %c0_i32_0 : i32, i32
  }
  func.func @transform_6(%arg0: i32) -> (i32, i32) {
    %c0_i32 = arith.constant 0 : i32
    %c0_i32_0 = arith.constant 0 : i32
    %c0_i32_1 = arith.constant 0 : i32
    return %c0_i32, %c0_i32_0 : i32, i32
  }
  func.func @transform_7(%arg0: i32) -> (i32, i32) {
    %c0_i32 = arith.constant 0 : i32
    %c0_i32_0 = arith.constant 0 : i32
    %c0_i32_1 = arith.constant 0 : i32
    return %c0_i32, %c0_i32_0 : i32, i32
  }
  func.func @transform_8(%arg0: i32) -> (i32, i32) {
    %c0_i32 = arith.constant 0 : i32
    %c0_i32_0 = arith.constant 0 : i32
    %c0_i32_1 = arith.constant 0 : i32
    return %c0_i32, %c0_i32_0 : i32, i32
  }
  func.func @transform_9(%arg0: i32) -> (i32, i32, i32) {
    %c0_i32 = arith.constant 0 : i32
    %c0_i32_0 = arith.constant 0 : i32
    %c0_i32_1 = arith.constant 0 : i32
    return %arg0, %c0_i32, %c0_i32_0 : i32, i32, i32
  }
}

</mosaic_0001>

<llo_original>
// kernel: tpu_custom_call.1
$region0: #{tpu_custom_call.1}
  #allocation0 [shape = 'u32[]', space=smem, size = 0x4, offset = 0x4, fixed_abs, tag = 'smem constant byte address 0x4 - core index']
  #allocation1 [shape = 'u32[144,128]{1,0:T(1,128)}', space=vmem, size = 0x12000, scoped, tag = 'internal scratch']
  #allocation2 [shape = 'f32[1,1]{1,0:T(1,128)S(6)}', space=smem, size = 0x200, scoped, tag = 'scoped memory for tpu_custom_call.1']
  %s0 = inlined_call_operand.hbm [shape: f32[2,16,256], index: 0, kind: input, shape index: {}]
  %s1 = inlined_call_operand.vmem [shape: f32[1,16], index: 1, kind: input, shape index: {}]
  %s2 = inlined_call_operand.<no memory space> [shape: f32[1,1], index: 2, kind: input, shape index: {}]
  %s3 = inlined_call_operand.vmem [shape: f32[16,4], index: 3, kind: input, shape index: {}]
  %s4 = inlined_call_operand.vmem [shape: f32[1,4], index: 4, kind: input, shape index: {}]
  %s5 = inlined_call_operand.vmem [shape: f32[1,4], index: 5, kind: input, shape index: {}]
  %s6 = inlined_call_operand.vmem [shape: f32[1,4], index: 6, kind: input, shape index: {}]
  %s7 = inlined_call_operand.vmem [shape: f32[4,16], index: 7, kind: input, shape index: {}]
  %s8 = inlined_call_operand.vmem [shape: f32[1,16], index: 8, kind: input, shape index: {}]
  %s9 = inlined_call_operand.hbm [shape: f32[2,16,256], index: 9, kind: output, shape index: {}]
  %s10 = sld [smem:[#allocation0]]
  $region73: #{tpu_custom_call.1} parent=0
    _
  %s12 = ssub.s32 1, %s10
  %s13 = scalar_select 0, %s12, %s10
  %14 = sst [smem:[#allocation2]] %s2
  $region1: #{tpu_custom_call.1} parent=0
    #allocation3 [shape = 'u8[32768]{0}', space=vmem, size = 0x8000, scoped, tag = 'input window, operand 0']
    #allocation4 [shape = 's32[2]{0}', space=sflag, size = 0x8, scoped, tag = 'scoped memory for tpu_custom_call.1']
    #allocation5 [shape = 's32[2]{0}', space=sflag, size = 0x8, scoped, tag = 'scoped memory for tpu_custom_call.1']
    #allocation6 [shape = 'u8[32768]{0}', space=vmem, size = 0x8000, scoped, tag = 'output window, operand 0']
    %15 = vsyncpa [#allocation4], 0
    %s16 = scalar_lea.sflag [#allocation4], 1
    %17 = vsyncpa %s16, 0
    %18 = vsyncpa [#allocation5], 0
    %s19 = scalar_lea.sflag [#allocation5], 1
    %20 = vsyncpa %s19, 0
    loop: start=0, step=1, limit=4
    $region2: #{tpu_custom_call.1} parent=1 // loop_pre_header
      _
    $region3: #{tpu_custom_call.1} parent=1 // loop_header
      %s22 = sphi 0, %s26
      %p23 = scmp.ge.s32.totalorder %s22, 4
      %s32 = sphi 0, %s34
      %s35 = sphi 0, %s32
      %s36 = sphi 0, %s35
      %s52 = sphi 0, %s36
      %s56 = sphi 0, %s56
      %s58 = sphi 0, %s56
      %s59 = sphi 0, %s58
      %s73 = sphi 0, %s59
      %s77 = sphi 0, %s77
      %s79 = sphi 0, %s77
      %s80 = sphi 0, %s79
      %s94 = sphi 0, %s80
      %s98 = sphi 0, %s98
      %s100 = sphi 0, %s98
      %s101 = sphi 0, %s100
      %s115 = sphi 0, %s101
      %s119 = sphi 0, %s119
      %s121 = sphi 0, %s119
      %s122 = sphi 0, %s121
      %s136 = sphi 0, %s122
      %s140 = sphi 0, %s140
      %s142 = sphi 0, %s140
      %s143 = sphi 0, %s142
      %s157 = sphi 0, %s143
      %s161 = sphi 0, %s161
      %s163 = sphi 0, %s161
      %s164 = sphi 0, %s163
      %s178 = sphi 0, %s164
      %s182 = sphi 0, %s182
      %s184 = sphi 0, %s182
      %s185 = sphi 0, %s184
      %s199 = sphi 0, %s185
      %s203 = sphi 0, %s203
      %s205 = sphi 0, %s203
      %s206 = sphi 0, %s205
      %s220 = sphi 0, %s206
      %s226 = sphi 0, %s228
      %s229 = sphi 0, %s226
      %s230 = sphi 0, %s229
      %s246 = sphi 0, %s230
    $region4: #{tpu_custom_call.1} parent=1 // loop_header_branch
      %25 = sbr.rel (%p23) target = $region8
    $region5: #{tpu_custom_call.1} parent=1 // loop_body
      %s27 = ssub.s32 %s22, 1
      %s28 = ssub.s32 %s22, 2
      %s29 = sadd.s32 %s22, 1
      %s30 = ssub.s32 %s22, %s29
      %p31 = scmp.eq.s32.totalorder %s30, 0
      %s33 = sadd.s32 %s32, 1
      %s34 = scalar_select %p31, %s32, %s33
      %p37 = pneg %p31
      %p38 = scmp.eq.s32.totalorder %s22, 1
      %p39 = por %p37, %p38
      %p40 = scmp.ne.s32.totalorder %s32, %s35
      %p41 = scmp.eq.s32.totalorder %s22, 0
      %p42 = por %p40, %p41
      %p43 = scmp.ne.s32.totalorder %s32, %s35
      %p44 = scmp.eq.s32.totalorder %s27, 1
      %p45 = por %p43, %p44
      %p46 = scmp.ne.s32.totalorder %s35, %s36
      %p47 = scmp.eq.s32.totalorder %s27, 0
      %p48 = por %p46, %p47
      %p49 = scmp.ne.s32.totalorder %s35, %s36
      %p50 = scmp.eq.s32.totalorder %s28, 1
      %p51 = por %p49, %p50
      %p53 = scmp.ne.s32.totalorder %s36, %s52
      %p54 = scmp.eq.s32.totalorder %s28, 0
      %p55 = por %p53, %p54
      %s57 = sadd.s32 %s56, 1
      %p60 = scmp.eq.s32.totalorder %s22, 1
      %p61 = scmp.ne.s32.totalorder %s56, %s58
      %p62 = scmp.eq.s32.totalorder %s22, 0
      %p63 = por %p61, %p62
      %p64 = scmp.ne.s32.totalorder %s56, %s58
      %p65 = scmp.eq.s32.totalorder %s27, 1
      %p66 = por %p64, %p65
      %p67 = scmp.ne.s32.totalorder %s58, %s59
      %p68 = scmp.eq.s32.totalorder %s27, 0
      %p69 = por %p67, %p68
      %p70 = scmp.ne.s32.totalorder %s58, %s59
      %p71 = scmp.eq.s32.totalorder %s28, 1
      %p72 = por %p70, %p71
      %p74 = scmp.ne.s32.totalorder %s59, %s73
      %p75 = scmp.eq.s32.totalorder %s28, 0
      %p76 = por %p74, %p75
      %s78 = sadd.s32 %s77, 1
      %p81 = scmp.eq.s32.totalorder %s22, 1
      %p82 = scmp.ne.s32.totalorder %s77, %s79
      %p83 = scmp.eq.s32.totalorder %s22, 0
      %p84 = por %p82, %p83
      %p85 = scmp.ne.s32.totalorder %s77, %s79
      %p86 = scmp.eq.s32.totalorder %s27, 1
      %p87 = por %p85, %p86
      %p88 = scmp.ne.s32.totalorder %s79, %s80
      %p89 = scmp.eq.s32.totalorder %s27, 0
      %p90 = por %p88, %p89
      %p91 = scmp.ne.s32.totalorder %s79, %s80
      %p92 = scmp.eq.s32.totalorder %s28, 1
      %p93 = por %p91, %p92
      %p95 = scmp.ne.s32.totalorder %s80, %s94
      %p96 = scmp.eq.s32.totalorder %s28, 0
      %p97 = por %p95, %p96
      %s99 = sadd.s32 %s98, 1
      %p102 = scmp.eq.s32.totalorder %s22, 1
      %p103 = scmp.ne.s32.totalorder %s98, %s100
      %p104 = scmp.eq.s32.totalorder %s22, 0
      %p105 = por %p103, %p104
      %p106 = scmp.ne.s32.totalorder %s98, %s100
      %p107 = scmp.eq.s32.totalorder %s27, 1
      %p108 = por %p106, %p107
      %p109 = scmp.ne.s32.totalorder %s100, %s101
      %p110 = scmp.eq.s32.totalorder %s27, 0
      %p111 = por %p109, %p110
      %p112 = scmp.ne.s32.totalorder %s100, %s101
      %p113 = scmp.eq.s32.totalorder %s28, 1
      %p114 = por %p112, %p113
      %p116 = scmp.ne.s32.totalorder %s101, %s115
      %p117 = scmp.eq.s32.totalorder %s28, 0
      %p118 = por %p116, %p117
      %s120 = sadd.s32 %s119, 1
      %p123 = scmp.eq.s32.totalorder %s22, 1
      %p124 = scmp.ne.s32.totalorder %s119, %s121
      %p125 = scmp.eq.s32.totalorder %s22, 0
      %p126 = por %p124, %p125
      %p127 = scmp.ne.s32.totalorder %s119, %s121
      %p128 = scmp.eq.s32.totalorder %s27, 1
      %p129 = por %p127, %p128
      %p130 = scmp.ne.s32.totalorder %s121, %s122
      %p131 = scmp.eq.s32.totalorder %s27, 0
      %p132 = por %p130, %p131
      %p133 = scmp.ne.s32.totalorder %s121, %s122
      %p134 = scmp.eq.s32.totalorder %s28, 1
      %p135 = por %p133, %p134
      %p137 = scmp.ne.s32.totalorder %s122, %s136
      %p138 = scmp.eq.s32.totalorder %s28, 0
      %p139 = por %p137, %p138
      %s141 = sadd.s32 %s140, 1
      %p144 = scmp.eq.s32.totalorder %s22, 1
      %p145 = scmp.ne.s32.totalorder %s140, %s142
      %p146 = scmp.eq.s32.totalorder %s22, 0
      %p147 = por %p145, %p146
      %p148 = scmp.ne.s32.totalorder %s140, %s142
      %p149 = scmp.eq.s32.totalorder %s27, 1
      %p150 = por %p148, %p149
      %p151 = scmp.ne.s32.totalorder %s142, %s143
      %p152 = scmp.eq.s32.totalorder %s27, 0
      %p153 = por %p151, %p152
      %p154 = scmp.ne.s32.totalorder %s142, %s143
      %p155 = scmp.eq.s32.totalorder %s28, 1
      %p156 = por %p154, %p155
      %p158 = scmp.ne.s32.totalorder %s143, %s157
      %p159 = scmp.eq.s32.totalorder %s28, 0
      %p160 = por %p158, %p159
      %s162 = sadd.s32 %s161, 1
      %p165 = scmp.eq.s32.totalorder %s22, 1
      %p166 = scmp.ne.s32.totalorder %s161, %s163
      %p167 = scmp.eq.s32.totalorder %s22, 0
      %p168 = por %p166, %p167
      %p169 = scmp.ne.s32.totalorder %s161, %s163
      %p170 = scmp.eq.s32.totalorder %s27, 1
      %p171 = por %p169, %p170
      %p172 = scmp.ne.s32.totalorder %s163, %s164
      %p173 = scmp.eq.s32.totalorder %s27, 0
      %p174 = por %p172, %p173
      %p175 = scmp.ne.s32.totalorder %s163, %s164
      %p176 = scmp.eq.s32.totalorder %s28, 1
      %p177 = por %p175, %p176
      %p179 = scmp.ne.s32.totalorder %s164, %s178
      %p180 = scmp.eq.s32.totalorder %s28, 0
      %p181 = por %p179, %p180
      %s183 = sadd.s32 %s182, 1
      %p186 = scmp.eq.s32.totalorder %s22, 1
      %p187 = scmp.ne.s32.totalorder %s182, %s184
      %p188 = scmp.eq.s32.totalorder %s22, 0
      %p189 = por %p187, %p188
      %p190 = scmp.ne.s32.totalorder %s182, %s184
      %p191 = scmp.eq.s32.totalorder %s27, 1
      %p192 = por %p190, %p191
      %p193 = scmp.ne.s32.totalorder %s184, %s185
      %p194 = scmp.eq.s32.totalorder %s27, 0
      %p195 = por %p193, %p194
      %p196 = scmp.ne.s32.totalorder %s184, %s185
      %p197 = scmp.eq.s32.totalorder %s28, 1
      %p198 = por %p196, %p197
      %p200 = scmp.ne.s32.totalorder %s185, %s199
      %p201 = scmp.eq.s32.totalorder %s28, 0
      %p202 = por %p200, %p201
      %s204 = sadd.s32 %s203, 1
      %p207 = scmp.eq.s32.totalorder %s22, 1
      %p208 = scmp.ne.s32.totalorder %s203, %s205
      %p209 = scmp.eq.s32.totalorder %s22, 0
      %p210 = por %p208, %p209
      %p211 = scmp.ne.s32.totalorder %s203, %s205
      %p212 = scmp.eq.s32.totalorder %s27, 1
      %p213 = por %p211, %p212
      %p214 = scmp.ne.s32.totalorder %s205, %s206
      %p215 = scmp.eq.s32.totalorder %s27, 0
      %p216 = por %p214, %p215
      %p217 = scmp.ne.s32.totalorder %s205, %s206
      %p218 = scmp.eq.s32.totalorder %s28, 1
      %p219 = por %p217, %p218
      %p221 = scmp.ne.s32.totalorder %s206, %s220
      %p222 = scmp.eq.s32.totalorder %s28, 0
      %p223 = por %p221, %p222
      %s224 = ssub.s32 %s22, %s29
      %p225 = scmp.eq.s32.totalorder %s224, 0
      %s227 = sadd.s32 %s226, 1
      %s228 = scalar_select %p225, %s226, %s227
      %p231 = pneg %p225
      %p232 = scmp.eq.s32.totalorder %s22, 1
      %p233 = por %p231, %p232
      %p234 = scmp.ne.s32.totalorder %s226, %s229
      %p235 = scmp.eq.s32.totalorder %s22, 0
      %p236 = por %p234, %p235
      %p237 = scmp.ne.s32.totalorder %s226, %s229
      %p238 = scmp.eq.s32.totalorder %s27, 1
      %p239 = por %p237, %p238
      %p240 = scmp.ne.s32.totalorder %s229, %s230
      %p241 = scmp.eq.s32.totalorder %s27, 0
      %p242 = por %p240, %p241
      %p243 = scmp.ne.s32.totalorder %s229, %s230
      %p244 = scmp.eq.s32.totalorder %s28, 1
      %p245 = por %p243, %p244
      %p247 = scmp.ne.s32.totalorder %s230, %s246
      %p248 = scmp.eq.s32.totalorder %s28, 0
      %p249 = por %p247, %p248
      %p250 = scmp.le.s32.totalorder 1, %s22
      %p251 = scmp.lt.s32.totalorder %s22, 3
      %p252 = pnand %p250, %p251
      %p253 = pneg %p252
      // Predicated region
      $region9: #{tpu_custom_call.1} parent=5 // pred_check
        _
      $region10: #{tpu_custom_call.1} parent=5 // pred_check_branch
        %255 = sbr.rel (%p252) target = $region12
      $region11: #{tpu_custom_call.1} parent=5 // pred_region
        %s256 = ssub.s32 %s22, 1
        // Predicated region
        $region13: #{tpu_custom_call.1} parent=11 // pred_check
          %p257 = pneg %p69
        $region14: #{tpu_custom_call.1} parent=11 // pred_check_branch
          %259 = sbr.rel (%p257) target = $region16
        $region15: #{tpu_custom_call.1} parent=11 // pred_region
          _
        $region16: #{tpu_custom_call.1} parent=11 // pred_fallthru
          _
        // Predicated region
        $region17: #{tpu_custom_call.1} parent=11 // pred_check
          %p260 = pneg %p90
        $region18: #{tpu_custom_call.1} parent=11 // pred_check_branch
          %262 = sbr.rel (%p260) target = $region20
        $region19: #{tpu_custom_call.1} parent=11 // pred_region
          _
        $region20: #{tpu_custom_call.1} parent=11 // pred_fallthru
          _
        // Predicated region
        $region21: #{tpu_custom_call.1} parent=11 // pred_check
          %p263 = pneg %p111
        $region22: #{tpu_custom_call.1} parent=11 // pred_check_branch
          %265 = sbr.rel (%p263) target = $region24
        $region23: #{tpu_custom_call.1} parent=11 // pred_region
          _
        $region24: #{tpu_custom_call.1} parent=11 // pred_fallthru
          _
        // Predicated region
        $region25: #{tpu_custom_call.1} parent=11 // pred_check
          %p266 = pneg %p132
        $region26: #{tpu_custom_call.1} parent=11 // pred_check_branch
          %268 = sbr.rel (%p266) target = $region28
        $region27: #{tpu_custom_call.1} parent=11 // pred_region
          _
        $region28: #{tpu_custom_call.1} parent=11 // pred_fallthru
          _
        // Predicated region
        $region29: #{tpu_custom_call.1} parent=11 // pred_check
          %p269 = pneg %p153
        $region30: #{tpu_custom_call.1} parent=11 // pred_check_branch
          %271 = sbr.rel (%p269) target = $region32
        $region31: #{tpu_custom_call.1} parent=11 // pred_region
          _
        $region32: #{tpu_custom_call.1} parent=11 // pred_fallthru
          _
        // Predicated region
        $region33: #{tpu_custom_call.1} parent=11 // pred_check
          %p272 = pneg %p174
        $region34: #{tpu_custom_call.1} parent=11 // pred_check_branch
          %274 = sbr.rel (%p272) target = $region36
        $region35: #{tpu_custom_call.1} parent=11 // pred_region
          _
        $region36: #{tpu_custom_call.1} parent=11 // pred_fallthru
          _
        // Predicated region
        $region37: #{tpu_custom_call.1} parent=11 // pred_check
          %p275 = pneg %p195
        $region38: #{tpu_custom_call.1} parent=11 // pred_check_branch
          %277 = sbr.rel (%p275) target = $region40
        $region39: #{tpu_custom_call.1} parent=11 // pred_region
          _
        $region40: #{tpu_custom_call.1} parent=11 // pred_fallthru
          _
        // Predicated region
        $region41: #{tpu_custom_call.1} parent=11 // pred_check
          %p278 = pneg %p216
        $region42: #{tpu_custom_call.1} parent=11 // pred_check_branch
          %280 = sbr.rel (%p278) target = $region44
        $region43: #{tpu_custom_call.1} parent=11 // pred_region
          _
        $region44: #{tpu_custom_call.1} parent=11 // pred_fallthru
          _
      $region12: #{tpu_custom_call.1} parent=5 // pred_fallthru
        _
      %p281 = scmp.lt.s32.totalorder %s22, 2
      // Predicated region
      $region45: #{tpu_custom_call.1} parent=5 // pred_check
        %p282 = pneg %p281
      $region46: #{tpu_custom_call.1} parent=5 // pred_check_branch
        %284 = sbr.rel (%p282) target = $region48
      $region47: #{tpu_custom_call.1} parent=5 // pred_region
        // Predicated region
        $region49: #{tpu_custom_call.1} parent=47 // pred_check
          %p285 = pneg %p42
        $region50: #{tpu_custom_call.1} parent=47 // pred_check_branch
          %287 = sbr.rel (%p285) target = $region52
        $region51: #{tpu_custom_call.1} parent=47 // pred_region
          %s288 = sand.u32 %s32, 1
          %s289 = scalar_lea.sflag [#allocation4], %s288
          %s290 = sand.u32 %s32, 1
          %s291 = smul.addr %s290, 32
          %s292 = scalar_lea.vmem [#allocation3], %s291
          %s294 = ssub.s32 512, 512
          %295 = vsyncadd %s289, %s294
          %s296 = smul.addr %s22, 4
          %s297 = smul.addr %s296, 128
          %s298 = scalar_lea.hbm %s0, %s297
          %s299 = sshll.u32 %s292, 4
          %s300 = int_to_ptr.vmem [resolvable:$true] %s299
          %305 = dma.hbm_to_vmem [thread:$0]  %s298, 512, %s300, %s289, 256, 256, 16
        $region52: #{tpu_custom_call.1} parent=47 // pred_fallthru
          _
      $region48: #{tpu_custom_call.1} parent=5 // pred_fallthru
        _
      %p306 = scmp.le.s32.totalorder 1, %s22
      %p307 = scmp.lt.s32.totalorder %s22, 3
      %p308 = pnand %p306, %p307
      %p309 = pneg %p308
      // Predicated region
      $region53: #{tpu_custom_call.1} parent=5 // pred_check
        _
      $region54: #{tpu_custom_call.1} parent=5 // pred_check_branch
        %311 = sbr.rel (%p308) target = $region56
      $region55: #{tpu_custom_call.1} parent=5 // pred_region
        %s312 = ssub.s32 %s22, 1
        %s313 = sand.u32 %s35, 1
        %s314 = scalar_lea.sflag [#allocation4], %s313
        %s315 = sand.u32 %s35, 1
        %s316 = smul.addr %s315, 32
        %s317 = scalar_lea.vmem [#allocation3], %s316
        // Predicated region
        $region57: #{tpu_custom_call.1} parent=55 // pred_check
          %p318 = pneg %p48
        $region58: #{tpu_custom_call.1} parent=55 // pred_check_branch
          %320 = sbr.rel (%p318) target = $region60
        $region59: #{tpu_custom_call.1} parent=55 // pred_region
          %321 = dma.done %s314, 512
        $region60: #{tpu_custom_call.1} parent=55 // pred_fallthru
          _
        %s322 = sand.u32 %s35, 1
        %s323 = scalar_lea.sflag [#allocation4], %s322
        %s324 = sand.u32 %s35, 1
        %s325 = smul.addr %s324, 32
        %s326 = scalar_lea.vmem [#allocation3], %s325
        %p327 = pneg %p48
        %p328 = pneg %p45
        %p329 = pneg %p69
        %p330 = pneg %p66
        %p331 = pneg %p90
        %p332 = pneg %p87
        %p333 = pneg %p111
        %p334 = pneg %p108
        %p335 = pneg %p132
        %p336 = pneg %p129
        %p337 = pneg %p153
        %p338 = pneg %p150
        %p339 = pneg %p174
        %p340 = pneg %p171
        %p341 = pneg %p195
        %p342 = pneg %p192
        %p343 = pneg %p216
        %p344 = pneg %p213
        %p345 = pneg %p242
        %p346 = pneg %p239
        %s347 = sand.u32 %s229, 1
        %s348 = scalar_lea.sflag [#allocation5], %s347
        %s349 = sand.u32 %s229, 1
        %s350 = smul.addr %s349, 32
        %s351 = scalar_lea.vmem [#allocation6], %s350
        %v352 = vld [vmem:[%s317] sm:$0xff]
        %v353 = vld [vmem:[%s317 + $0x8] sm:$0xff]
        %v354 = vld [vmem:[%s317 + $0x10] sm:$0xff]
        %v355 = vld [vmem:[%s317 + $0x18] sm:$0xff]
        %v356 = vld [vmem:[%s1] sm:$0x1]
        %s357 = sld [smem:[#allocation2]]
        %v358 = vstv %s357
        %vm359 = vcmask 130048
        %v361 = vsel %vm359, %v356, 0
        %363 = vmatprep.subr.mxu0 %v353
        %364 = vmatpush1.msra.mxu0 %v352
        %365 = vmatprep.subr.mxu0 %v355
        %366 = vmatpush1.msra.mxu0 %v354
        %367 = vmatprep.subr.mxu0 0.0
        %368 = vmatpush1.msra.mxu0 0.0
        %369 = vmatprep.subr.mxu0 0.0
        %370 = vmatpush1.msra.mxu0 0.0
        %371 = vmatprep.subr.mxu0 0.0
        %372 = vmatpush1.msra.mxu0 0.0
        %373 = vmatprep.subr.mxu0 0.0
        %374 = vmatpush1.msra.mxu0 0.0
        %375 = vmatprep.subr.mxu0 0.0
        %376 = vmatpush1.msra.mxu0 0.0
        %377 = vmatprep.subr.mxu0 0.0
        %378 = vmatpush1.msra.mxu0 0.0
        %379 = vmatprep.subr.mxu0 0.0
        %380 = vmatpush1.msra.mxu0 0.0
        %381 = vmatprep.subr.mxu0 0.0
        %382 = vmatpush1.msra.mxu0 0.0
        %383 = vmatprep.subr.mxu0 0.0
        %384 = vmatpush1.msra.mxu0 0.0
        %385 = vmatprep.subr.mxu0 0.0
        %386 = vmatpush1.msra.mxu0 0.0
        %387 = vmatprep.subr.mxu0 0.0
        %388 = vmatpush1.msra.mxu0 0.0
        %389 = vmatprep.subr.mxu0 0.0
        %390 = vmatpush1.msra.mxu0 0.0
        %391 = vmatprep.subr.mxu0 0.0
        %392 = vmatpush1.msra.mxu0 0.0
        %393 = vmatprep.subr.mxu0 0.0
        %394 = vmatpush1.msra.mxu0 0.0
        %395 = vmatprep.subr.mxu0 0.0
        %396 = vmatpush1.msra.mxu0 0.0
        %397 = vmatprep.subr.mxu0 0.0
        %398 = vmatpush1.msra.mxu0 0.0
        %399 = vmatprep.subr.mxu0 0.0
        %400 = vmatpush1.msra.mxu0 0.0
        %401 = vmatprep.subr.mxu0 0.0
        %402 = vmatpush1.msra.mxu0 0.0
        %403 = vmatprep.subr.mxu0 0.0
        %404 = vmatpush1.msra.mxu0 0.0
        %405 = vmatprep.subr.mxu0 0.0
        %406 = vmatpush1.msra.mxu0 0.0
        %407 = vmatprep.subr.mxu0 0.0
        %408 = vmatpush1.msra.mxu0 0.0
        %409 = vmatprep.subr.mxu0 0.0
        %410 = vmatpush1.msra.mxu0 0.0
        %411 = vmatprep.subr.mxu0 0.0
        %412 = vmatpush1.msra.mxu0 0.0
        %413 = vmatprep.subr.mxu0 0.0
        %414 = vmatpush1.msra.mxu0 0.0
        %415 = vmatprep.subr.mxu0 0.0
        %416 = vmatpush1.msra.mxu0 0.0
        %417 = vmatprep.subr.mxu0 0.0
        %418 = vmatpush1.msra.mxu0 0.0
        %419 = vmatprep.subr.mxu0 0.0
        %420 = vmatpush1.msra.mxu0 0.0
        %421 = vmatprep.subr.mxu0 0.0
        %422 = vmatpush1.msra.mxu0 0.0
        %423 = vmatprep.subr.mxu0 0.0
        %424 = vmatpush1.msra.mxu0 0.0
        %425 = vmatprep.subr.mxu0 0.0
        %426 = vmatpush1.msra.mxu0 0.0
        %427 = vmatprep.mubr.f32.mxu0 0.0
        %428 = vmatmul.mubr.f32.gmra.mrb[0].mxu0 %v361
        %v429 = vpop.f32.mrb[0].mxu0
        %v430 = vadd.f32 %v358, %v429
        %v431 = vpop.f32.mrb[0].mxu0
        %v432 = vadd.f32 %v358, %v431
        %433 = vdwg.mxu0
        %vm434 = vcmask 1040384
        %v435 = vsel %vm434, %v430, -inf
        %v436 = vsel %vm434, %v432, -inf
        %v437 = vmax.f32 %v435, %v436
        %438 = vmax.xlane.f32.xlu0 %v437
        %v439 = vpop.xlane.xlu0 %438
        %v440 = vsub.f32 %v430, %v439
        %v441 = vsub.f32 %v432, %v439
        %v442 = vmul.f32 %v440, 1.442695
        %v443 = vpow.pop %v442
        %v444 = vmul.f32 %v441, 1.442695
        %v445 = vpow.pop %v444
        %v446 = vsel %vm434, %v443, 0.0
        %v447 = vsel %vm434, %v445, 0.0
        %v448 = vadd.f32 %v446, %v447
        %449 = vadd.xlane.f32.xlu0 %v448
        %v450 = vpop.xlane.xlu0 %449
        %451 = vmatprep.subr.mxu0 %v353
        %452 = vmatpush1.xpose.msra.mxu0 %v352
        %453 = vmatprep.subr.mxu0 %v355
        %454 = vmatpush1.xpose.msra.mxu0 %v354
        %455 = vmatprep.subr.mxu0 0.0
        %456 = vmatpush1.xpose.msra.mxu0 0.0
        %457 = vmatprep.subr.mxu0 0.0
        %458 = vmatpush1.xpose.msra.mxu0 0.0
        %459 = vmatprep.subr.mxu0 0.0
        %460 = vmatpush1.xpose.msra.mxu0 0.0
        %461 = vmatprep.subr.mxu0 0.0
        %462 = vmatpush1.xpose.msra.mxu0 0.0
        %463 = vmatprep.subr.mxu0 0.0
        %464 = vmatpush1.xpose.msra.mxu0 0.0
        %465 = vmatprep.subr.mxu0 0.0
        %466 = vmatpush1.xpose.msra.mxu0 0.0
        %467 = vmatprep.subr.mxu0 0.0
        %468 = vmatpush1.xpose.msra.mxu0 0.0
        %469 = vmatprep.subr.mxu0 0.0
        %470 = vmatpush1.xpose.msra.mxu0 0.0
        %471 = vmatprep.subr.mxu0 0.0
        %472 = vmatpush1.xpose.msra.mxu0 0.0
        %473 = vmatprep.subr.mxu0 0.0
        %474 = vmatpush1.xpose.msra.mxu0 0.0
        %475 = vmatprep.subr.mxu0 0.0
        %476 = vmatpush1.xpose.msra.mxu0 0.0
        %477 = vmatprep.subr.mxu0 0.0
        %478 = vmatpush1.xpose.msra.mxu0 0.0
        %479 = vmatprep.subr.mxu0 0.0
        %480 = vmatpush1.xpose.msra.mxu0 0.0
        %481 = vmatprep.subr.mxu0 0.0
        %482 = vmatpush1.xpose.msra.mxu0 0.0
        %483 = vmatprep.subr.mxu0 0.0
        %484 = vmatpush1.xpose.msra.mxu0 0.0
        %485 = vmatprep.subr.mxu0 0.0
        %486 = vmatpush1.xpose.msra.mxu0 0.0
        %487 = vmatprep.subr.mxu0 0.0
        %488 = vmatpush1.xpose.msra.mxu0 0.0
        %489 = vmatprep.subr.mxu0 0.0
        %490 = vmatpush1.xpose.msra.mxu0 0.0
        %491 = vmatprep.subr.mxu0 0.0
        %492 = vmatpush1.xpose.msra.mxu0 0.0
        %493 = vmatprep.subr.mxu0 0.0
        %494 = vmatpush1.xpose.msra.mxu0 0.0
        %495 = vmatprep.subr.mxu0 0.0
        %496 = vmatpush1.xpose.msra.mxu0 0.0
        %497 = vmatprep.subr.mxu0 0.0
        %498 = vmatpush1.xpose.msra.mxu0 0.0
        %499 = vmatprep.subr.mxu0 0.0
        %500 = vmatpush1.xpose.msra.mxu0 0.0
        %501 = vmatprep.subr.mxu0 0.0
        %502 = vmatpush1.xpose.msra.mxu0 0.0
        %503 = vmatprep.subr.mxu0 0.0
        %504 = vmatpush1.xpose.msra.mxu0 0.0
        %505 = vmatprep.subr.mxu0 0.0
        %506 = vmatpush1.xpose.msra.mxu0 0.0
        %507 = vmatprep.subr.mxu0 0.0
        %508 = vmatpush1.xpose.msra.mxu0 0.0
        %509 = vmatprep.subr.mxu0 0.0
        %510 = vmatpush1.xpose.msra.mxu0 0.0
        %511 = vmatprep.subr.mxu0 0.0
        %512 = vmatpush1.xpose.msra.mxu0 0.0
        %513 = vmatprep.subr.mxu0 0.0
        %514 = vmatpush1.xpose.msra.mxu0 0.0
        %515 = vmatprep.mubr.f32.mxu0 %v445
        %516 = vmatmul.mubr.f32.gmra.mrb[0].mxu0 %v443
        %v517 = vpop.f32.mrb[0].mxu0
        %v518 = vadd.f32 0.0, %v517
        %v519 = vpop.f32.mrb[0].mxu0
        %520 = vdwg.mxu0
        %v521 = vrcp.pop %v450
        %v522 = vmul.f32 %v518, %v521
        %v523 = vld [vmem:[%s3] sm:$0xff]
        %v524 = vld [vmem:[%s3 + $0x8] sm:$0xff]
        %v525 = vld [vmem:[%s4] sm:$0x1]
        %v527 = vsel %vm359, %v522, 0
        %529 = vmatprep.subr.mxu0 0.0
        %530 = vmatpush1.msra.mxu0 %v523
        %531 = vmatprep.subr.mxu0 0.0
        %532 = vmatpush1.msra.mxu0 %v524
        %533 = vmatprep.subr.mxu0 0.0
        %534 = vmatpush1.msra.mxu0 0.0
        %535 = vmatprep.subr.mxu0 0.0
        %536 = vmatpush1.msra.mxu0 0.0
        %537 = vmatprep.subr.mxu0 0.0
        %538 = vmatpush1.msra.mxu0 0.0
        %539 = vmatprep.subr.mxu0 0.0
        %540 = vmatpush1.msra.mxu0 0.0
        %541 = vmatprep.subr.mxu0 0.0
        %542 = vmatpush1.msra.mxu0 0.0
        %543 = vmatprep.subr.mxu0 0.0
        %544 = vmatpush1.msra.mxu0 0.0
        %545 = vmatprep.subr.mxu0 0.0
        %546 = vmatpush1.msra.mxu0 0.0
        %547 = vmatprep.subr.mxu0 0.0
        %548 = vmatpush1.msra.mxu0 0.0
        %549 = vmatprep.subr.mxu0 0.0
        %550 = vmatpush1.msra.mxu0 0.0
        %551 = vmatprep.subr.mxu0 0.0
        %552 = vmatpush1.msra.mxu0 0.0
        %553 = vmatprep.subr.mxu0 0.0
        %554 = vmatpush1.msra.mxu0 0.0
        %555 = vmatprep.subr.mxu0 0.0
        %556 = vmatpush1.msra.mxu0 0.0
        %557 = vmatprep.subr.mxu0 0.0
        %558 = vmatpush1.msra.mxu0 0.0
        %559 = vmatprep.subr.mxu0 0.0
        %560 = vmatpush1.msra.mxu0 0.0
        %561 = vmatprep.subr.mxu0 0.0
        %562 = vmatpush1.msra.mxu0 0.0
        %563 = vmatprep.subr.mxu0 0.0
        %564 = vmatpush1.msra.mxu0 0.0
        %565 = vmatprep.subr.mxu0 0.0
        %566 = vmatpush1.msra.mxu0 0.0
        %567 = vmatprep.subr.mxu0 0.0
        %568 = vmatpush1.msra.mxu0 0.0
        %569 = vmatprep.subr.mxu0 0.0
        %570 = vmatpush1.msra.mxu0 0.0
        %571 = vmatprep.subr.mxu0 0.0
        %572 = vmatpush1.msra.mxu0 0.0
        %573 = vmatprep.subr.mxu0 0.0
        %574 = vmatpush1.msra.mxu0 0.0
        %575 = vmatprep.subr.mxu0 0.0
        %576 = vmatpush1.msra.mxu0 0.0
        %577 = vmatprep.subr.mxu0 0.0
        %578 = vmatpush1.msra.mxu0 0.0
        %579 = vmatprep.subr.mxu0 0.0
        %580 = vmatpush1.msra.mxu0 0.0
        %581 = vmatprep.subr.mxu0 0.0
        %582 = vmatpush1.msra.mxu0 0.0
        %583 = vmatprep.subr.mxu0 0.0
        %584 = vmatpush1.msra.mxu0 0.0
        %585 = vmatprep.subr.mxu0 0.0
        %586 = vmatpush1.msra.mxu0 0.0
        %587 = vmatprep.subr.mxu0 0.0
        %588 = vmatpush1.msra.mxu0 0.0
        %589 = vmatprep.subr.mxu0 0.0
        %590 = vmatpush1.msra.mxu0 0.0
        %591 = vmatprep.subr.mxu0 0.0
        %592 = vmatpush1.msra.mxu0 0.0
        %593 = vmatprep.mubr.f32.mxu0 0.0
        %594 = vmatmul.mubr.f32.gmra.mrb[0].mxu0 %v527
        %v595 = vpop.f32.mrb[0].mxu0
        %v596 = vadd.f32 %v525, %v595
        %v597 = vpop.f32.mrb[0].mxu0
        %598 = vdwg.mxu0
        %vm599 = vcmask 24576
        %v600 = vsel %vm599, %v596, 0.0
        %601 = vadd.xlane.f32.xlu0 %v600
        %v602 = vpop.xlane.xlu0 %601
        %v603 = vrcp.pop 4.0
        %v604 = vmul.f32 %v602, %v603
        %v605 = vsub.f32 %v596, %v604
        %v606 = vmul.f32 %v605, %v605
        %v607 = vsel %vm599, %v606, 0.0
        %608 = vadd.xlane.f32.xlu0 %v607
        %v609 = vpop.xlane.xlu0 %608
        %v610 = vmul.f32 %v609, %v603
        %v611 = vadd.f32 %v610, 1e-05
        %v612 = vrsqrt.pop %v611
        %v613 = vmul.f32 %v605, %v612
        %v614 = vld [vmem:[%s5] sm:$0x1]
        %v615 = vmul.f32 %v613, %v614
        %v616 = vld [vmem:[%s6] sm:$0x1]
        %v617 = vadd.f32 %v615, %v616
        %v618 = vmax.f32 %v617, 0.0
        %v619 = vld [vmem:[%s7] sm:$0xf]
        %v620 = vld [vmem:[%s8] sm:$0x1]
        %vm621 = vcmask 31744
        %v623 = vsel %vm621, %v618, 0
        %vm625 = vcmask 1043456
        %v627 = vsel %vm625, %v619, 0
        %629 = vmatprep.subr.mxu0 0.0
        %630 = vmatpush1.msra.mxu0 %v627
        %631 = vmatprep.subr.mxu0 0.0
        %632 = vmatpush1.msra.mxu0 0.0
        %633 = vmatprep.subr.mxu0 0.0
        %634 = vmatpush1.msra.mxu0 0.0
        %635 = vmatprep.subr.mxu0 0.0
        %636 = vmatpush1.msra.mxu0 0.0
        %637 = vmatprep.subr.mxu0 0.0
        %638 = vmatpush1.msra.mxu0 0.0
        %639 = vmatprep.subr.mxu0 0.0
        %640 = vmatpush1.msra.mxu0 0.0
        %641 = vmatprep.subr.mxu0 0.0
        %642 = vmatpush1.msra.mxu0 0.0
        %643 = vmatprep.subr.mxu0 0.0
        %644 = vmatpush1.msra.mxu0 0.0
        %645 = vmatprep.subr.mxu0 0.0
        %646 = vmatpush1.msra.mxu0 0.0
        %647 = vmatprep.subr.mxu0 0.0
        %648 = vmatpush1.msra.mxu0 0.0
        %649 = vmatprep.subr.mxu0 0.0
        %650 = vmatpush1.msra.mxu0 0.0
        %651 = vmatprep.subr.mxu0 0.0
        %652 = vmatpush1.msra.mxu0 0.0
        %653 = vmatprep.subr.mxu0 0.0
        %654 = vmatpush1.msra.mxu0 0.0
        %655 = vmatprep.subr.mxu0 0.0
        %656 = vmatpush1.msra.mxu0 0.0
        %657 = vmatprep.subr.mxu0 0.0
        %658 = vmatpush1.msra.mxu0 0.0
        %659 = vmatprep.subr.mxu0 0.0
        %660 = vmatpush1.msra.mxu0 0.0
        %661 = vmatprep.subr.mxu0 0.0
        %662 = vmatpush1.msra.mxu0 0.0
        %663 = vmatprep.subr.mxu0 0.0
        %664 = vmatpush1.msra.mxu0 0.0
        %665 = vmatprep.subr.mxu0 0.0
        %666 = vmatpush1.msra.mxu0 0.0
        %667 = vmatprep.subr.mxu0 0.0
        %668 = vmatpush1.msra.mxu0 0.0
        %669 = vmatprep.subr.mxu0 0.0
        %670 = vmatpush1.msra.mxu0 0.0
        %671 = vmatprep.subr.mxu0 0.0
        %672 = vmatpush1.msra.mxu0 0.0
        %673 = vmatprep.subr.mxu0 0.0
        %674 = vmatpush1.msra.mxu0 0.0
        %675 = vmatprep.subr.mxu0 0.0
        %676 = vmatpush1.msra.mxu0 0.0
        %677 = vmatprep.subr.mxu0 0.0
        %678 = vmatpush1.msra.mxu0 0.0
        %679 = vmatprep.subr.mxu0 0.0
        %680 = vmatpush1.msra.mxu0 0.0
        %681 = vmatprep.subr.mxu0 0.0
        %682 = vmatpush1.msra.mxu0 0.0
        %683 = vmatprep.subr.mxu0 0.0
        %684 = vmatpush1.msra.mxu0 0.0
        %685 = vmatprep.subr.mxu0 0.0
        %686 = vmatpush1.msra.mxu0 0.0
        %687 = vmatprep.subr.mxu0 0.0
        %688 = vmatpush1.msra.mxu0 0.0
        %689 = vmatprep.subr.mxu0 0.0
        %690 = vmatpush1.msra.mxu0 0.0
        %691 = vmatprep.subr.mxu0 0.0
        %692 = vmatpush1.msra.mxu0 0.0
        %693 = vmatprep.mubr.f32.mxu0 0.0
        %694 = vmatmul.mubr.f32.gmra.mrb[0].mxu0 %v623
        %v695 = vpop.f32.mrb[0].mxu0
        %v696 = vadd.f32 %v620, %v695
        %v697 = vpop.f32.mrb[0].mxu0
        %698 = vdwg.mxu0
        %v699 = vlaneseq
        %v700 = vshrl.u32 %v699, 7
        %v701 = vsub.s32 0, %v700
        %v702 = vrot.slane %v696, %v701
        %704 = vbcast.lane.b32.xlu0 %v702, 256
        %v705 = vpop.permute.xlu0 %704
        %s707 = sor.u32 256, 8
        %708 = vbcast.lane.b32.xlu0 %v702, %s707
        %v709 = vpop.permute.xlu0 %708
        %v710 = vadd.f32 %v352, %v705
        %v711 = vadd.f32 %v353, %v705
        %v712 = vadd.f32 %v354, %v709
        %v713 = vadd.f32 %v355, %v709
        %714 = vst [vmem:[%s351] sm:$0xff] %v710
        %715 = vst [vmem:[%s351 + $0x8] sm:$0xff] %v711
        %716 = vst [vmem:[%s351 + $0x10] sm:$0xff] %v712
        %717 = vst [vmem:[%s351 + $0x18] sm:$0xff] %v713
        %s718 = sand.u32 %s229, 1
        %s719 = scalar_lea.sflag [#allocation5], %s718
        %s720 = sand.u32 %s229, 1
        %s721 = smul.addr %s720, 32
        %s722 = scalar_lea.vmem [#allocation6], %s721
        // Predicated region
        $region61: #{tpu_custom_call.1} parent=55 // pred_check
          %p723 = pneg %p239
        $region62: #{tpu_custom_call.1} parent=55 // pred_check_branch
          %725 = sbr.rel (%p723) target = $region64
        $region63: #{tpu_custom_call.1} parent=55 // pred_region
          %s727 = ssub.s32 512, 512
          %728 = vsyncadd %s719, %s727
          %s729 = smul.addr %s27, 4
          %s730 = smul.addr %s729, 128
          %s731 = scalar_lea.hbm %s9, %s730
          %s732 = sshll.u32 %s722, 4
          %s733 = int_to_ptr.vmem [resolvable:$true] %s732
          %738 = dma.vmem_to_hbm [thread:$0]  %s733, 512, %s731, %s719, 256, 256, 16
        $region64: #{tpu_custom_call.1} parent=55 // pred_fallthru
          _
      $region56: #{tpu_custom_call.1} parent=5 // pred_fallthru
        _
      %p739 = scmp.le.s32.totalorder 2, %s22
      // Predicated region
      $region65: #{tpu_custom_call.1} parent=5 // pred_check
        %p740 = pneg %p739
      $region66: #{tpu_custom_call.1} parent=5 // pred_check_branch
        %742 = sbr.rel (%p740) target = $region68
      $region67: #{tpu_custom_call.1} parent=5 // pred_region
        %s743 = ssub.s32 %s22, 2
        // Predicated region
        $region69: #{tpu_custom_call.1} parent=67 // pred_check
          %p744 = pneg %p245
        $region70: #{tpu_custom_call.1} parent=67 // pred_check_branch
          %746 = sbr.rel (%p744) target = $region72
        $region71: #{tpu_custom_call.1} parent=67 // pred_region
          %s747 = sand.u32 %s230, 1
          %s748 = scalar_lea.sflag [#allocation5], %s747
          %s749 = sand.u32 %s230, 1
          %s750 = smul.addr %s749, 32
          %s751 = scalar_lea.vmem [#allocation6], %s750
          %752 = dma.done %s748, 512
        $region72: #{tpu_custom_call.1} parent=67 // pred_fallthru
          _
      $region68: #{tpu_custom_call.1} parent=5 // pred_fallthru
        _
    $region6: #{tpu_custom_call.1} parent=1 // loop_footer
      %s26 = sadd.s32 1, %s22
    $region7: #{tpu_custom_call.1} parent=1 // loop_footer_branch
      %21 = sbr.rel target = $region3
    $region8: #{tpu_custom_call.1} parent=1 // loop_exit
      _
    %753 = vsyncpa [#allocation4], 1
    %s754 = scalar_lea.sflag [#allocation4], 1
    %755 = vsyncpa %s754, 1
    %756 = vsyncpa [#allocation5], 1
    %s757 = scalar_lea.sflag [#allocation5], 1
    %758 = vsyncpa %s757, 1

</llo_original>
